<compile_context>
chip_gen: v5e
topology: v5e:2x2
jax: 0.10.0
libtpu: 0.0.40
codegen_flags: <defaults>
</compile_context>

<pallas_src>
import functools

import jax
import jax.numpy as jnp
from jax.experimental import pallas as pl
from jax.experimental.pallas import tpu as pltpu

_MiB = 1024 * 1024


def _round_up(x, m):
    return (x + m - 1) // m * m


def _physical_vmem_bytes():
    """Best-effort physical VMEM per TensorCore (conservative fallback 64 MiB)."""
    try:
        info = pltpu.get_tpu_info()
        v = getattr(info, "vmem_capacity_bytes", None)
        if v:
            return int(v)
    except Exception:
        pass
    try:
        kind = jax.devices()[0].device_kind.lower()
        if "v5" in kind or "v6" in kind:
            return 128 * _MiB
    except Exception:
        pass
    return 64 * _MiB       # v7x-safe default


def _pick_tile_l(l_rows, per_row_bytes, fixed_bytes, budget_bytes, max_tile=2048):
    """Largest multiple-of-8 row tile that keeps per-step VMEM under budget."""
    l8 = _round_up(max(l_rows, 1), 8)
    avail = budget_bytes - fixed_bytes
    tile = 8
    if avail > per_row_bytes * 8:
        tile = (avail // per_row_bytes) // 8 * 8
    return max(8, min(tile, l8, max_tile))


# ----------------------------- Pallas kernels ------------------------------ #

def _matmul_bias_lrelu_kernel(p_ref, w_ref, b_ref, o_ref, *, negative_slope):
    """Small-channel path: patches were built in the wrapper.

    p_ref: (1, TILE_L, K)      bf16 im2col patches
    w_ref: (K, OC_pad)         bf16 weight
    b_ref: (1, OC_pad)         f32 bias
    o_ref: (1, TILE_L, OC_pad) bf16 output tile
    """
    acc = jnp.dot(p_ref[0], w_ref[...], preferred_element_type=jnp.float32)
    acc = acc + b_ref[...]
    acc = jnp.where(acc >= 0, acc, negative_slope * acc)
    o_ref[0] = acc.astype(o_ref.dtype)


def _fused_conv_lrelu_kernel(x_ref, w_ref, b_ref, o_ref, *, kh, kw, stride,
                             wq, tile_l, negative_slope):
    """Large-channel path: fused stride-phase im2col + matmul + bias + LeakyReLU.

    x_ref: (1, S, S, H_q*W_q, C)  phase-decomposed NHWC input (bf16), resident
                                  across M steps (index_map ignores m)
    w_ref: (KH*KW*C, OC_pad)      weight, K ordered (kh, kw, c)  (bf16)
    b_ref: (1, OC_pad)            bias (f32)
    o_ref: (1, TILE_L, OC_pad)    output rows r = oh*W_q + ow for this M tile
    """
    m = pl.program_id(1)
    base = pl.multiple_of(m * tile_l, 8)          # tile_l is a multiple of 8
    pieces = []
    for i in range(kh):
        for j in range(kw):
            off = (i // stride) * wq + (j // stride)
            pieces.append(
                x_ref[0, i % stride, j % stride, pl.ds(base + off, tile_l), :])
    patches = jnp.concatenate(pieces, axis=-1)                  # (TILE_L, K)

    acc = jnp.dot(patches, w_ref[...], preferred_element_type=jnp.float32)
    acc = acc + b_ref[...]
    acc = jnp.where(acc >= 0, acc, negative_slope * acc)
    o_ref[0] = acc.astype(o_ref.dtype)


# ------------------------------ JAX wrappers -------------------------------- #

def _small_channel_forward(x_nhwc, w2d, b2d, *, KH, KW, S, OH, OW, OC, OC_pad,
                           negative_slope, compute_dtype, out_dtype,
                           vmem_limit, budget):
    N, H, W, C = x_nhwc.shape
    K = KH * KW * C

    # Wrapper-side im2col, K ordered (kh, kw, c) to match w2d.  Read
    # amplification (KH*KW x) is negligible for C*KW < 128 inputs.
    pieces = []
    for i in range(KH):
        for j in range(KW):
            pieces.append(x_nhwc[:, i:i + (OH - 1) * S + 1:S,
                                 j:j + (OW - 1) * S + 1:S, :])
    patches = jnp.concatenate(pieces, axis=-1).reshape(N, OH * OW, K)

    L = OH * OW
    per_row = 6 * K + 8 * OC_pad                 # patch dbuf + acc + out dbuf
    fixed = 4 * K * OC_pad + 8 * OC_pad + 2 * _MiB
    tile_l = _pick_tile_l(L, per_row, fixed, budget)
    num_m = pl.cdiv(L, tile_l)
    l_pad = num_m * tile_l

    patches = jnp.pad(patches, ((0, 0), (0, l_pad - L), (0, 0))).astype(compute_dtype)

    kernel = functools.partial(_matmul_bias_lrelu_kernel,
                               negative_slope=negative_slope)

    out_isize = jnp.dtype(out_dtype).itemsize
    flops = 2 * N * L * K * OC_pad
    bytes_accessed = (N * l_pad * K * 2 + K * OC_pad * 2 + OC_pad * 4
                      + N * l_pad * OC_pad * out_isize)

    y = pl.pallas_call(
        kernel,
        out_shape=jax.ShapeDtypeStruct((N, l_pad, OC_pad), out_dtype),
        grid_spec=pltpu.PrefetchScalarGridSpec(
            num_scalar_prefetch=0,
            grid=(N, num_m),
            in_specs=[
                pl.BlockSpec((1, tile_l, K), lambda n, m: (n, m, 0)),
                pl.BlockSpec((K, OC_pad), lambda n, m: (0, 0)),     # resident
                pl.BlockSpec((1, OC_pad), lambda n, m: (0, 0)),     # resident
            ],
            out_specs=pl.BlockSpec((1, tile_l, OC_pad), lambda n, m: (n, m, 0)),
        ),
        compiler_params=pltpu.CompilerParams(
            dimension_semantics=("parallel", "parallel"),
            vmem_limit_bytes=vmem_limit),
        cost_estimate=pl.CostEstimate(flops=flops, transcendentals=0,
                                      bytes_accessed=bytes_accessed),
    )(patches, w2d, b2d)

    return y[:, :L, :OC].reshape(N, OH, OW, OC)


def _phase_forward(x_nhwc, w2d, b2d, *, KH, KW, S, OH, OW, OC, OC_pad,
                   negative_slope, compute_dtype, out_dtype, vmem_limit, budget):
    N, H, W, C = x_nhwc.shape
    K = KH * KW * C
    qh_max = (KH - 1) // S
    qw_max = (KW - 1) // S

    # Quotient grid; W_q rounded up to a sublane multiple so the dominant part
    # of each per-piece slice offset is 8-aligned.
    W_q = _round_up(max(OW + qw_max, -(-W // S)), 8)
    H_q0 = max(OH + qh_max, -(-H // S))

    L = (OH - 1) * W_q + OW                      # flat output rows r = oh*W_q + ow

    per_row = 4 * K + 8 * OC_pad                 # patches + acc + out dbuf
    fixed = (4 * S * S * H_q0 * W_q * C          # resident input block (dbuf, bf16)
             + 4 * K * OC_pad + 8 * OC_pad + 2 * _MiB)
    tile_l = _pick_tile_l(L, per_row, fixed, budget)
    num_m = pl.cdiv(L, tile_l)
    l_pad = num_m * tile_l

    # Phase rows must cover every slice: max exclusive index is
    # l_pad + qh_max*W_q + qw_max.
    need_rows = l_pad + qh_max * W_q + qw_max
    H_q = max(H_q0, -(-need_rows // W_q))

    # Stride-phase decomposition (one layout pass, no read amplification):
    #   x_s[n, a, b, p*W_q + q, c] = x[n, p*S + a, q*S + b, c]
    x_p = jnp.pad(x_nhwc, ((0, 0), (0, S * H_q - H), (0, S * W_q - W), (0, 0)))
    if S == 1:
        x_s = x_p.reshape(N, 1, 1, H_q * W_q, C)     # identity phase: pure reshape
    else:
        x_s = (x_p.reshape(N, H_q, S, W_q, S, C)
                  .transpose(0, 2, 4, 1, 3, 5)
                  .reshape(N, S, S, H_q * W_q, C))
    x_s = x_s.astype(compute_dtype)

    kernel = functools.partial(
        _fused_conv_lrelu_kernel,
        kh=KH, kw=KW, stride=S, wq=W_q, tile_l=tile_l,
        negative_slope=negative_slope)

    out_isize = jnp.dtype(out_dtype).itemsize
    flops = 2 * N * L * K * OC_pad
    bytes_accessed = (N * S * S * H_q * W_q * C * 2 + K * OC_pad * 2 + OC_pad * 4
                      + N * l_pad * OC_pad * out_isize)

    y = pl.pallas_call(
        kernel,
        out_shape=jax.ShapeDtypeStruct((N, l_pad, OC_pad), out_dtype),
        grid_spec=pltpu.PrefetchScalarGridSpec(
            num_scalar_prefetch=0,
            grid=(N, num_m),
            in_specs=[
                # Whole-image block; index_map ignores m -> not re-DMA'd across
                # consecutive M steps of the same image.
                pl.BlockSpec((1, S, S, H_q * W_q, C),
                             lambda n, m: (n, 0, 0, 0, 0)),
                pl.BlockSpec((K, OC_pad), lambda n, m: (0, 0)),     # resident
                pl.BlockSpec((1, OC_pad), lambda n, m: (0, 0)),     # resident
            ],
            out_specs=pl.BlockSpec((1, tile_l, OC_pad), lambda n, m: (n, m, 0)),
        ),
        compiler_params=pltpu.CompilerParams(
            dimension_semantics=("parallel", "parallel"),
            vmem_limit_bytes=vmem_limit),
        cost_estimate=pl.CostEstimate(flops=flops, transcendentals=0,
                                      bytes_accessed=bytes_accessed),
    )(x_s, w2d, b2d)

    # Decode: r = oh*W_q + ow; drop padded rows, junk columns, padded channels.
    rows_full = OH * W_q
    if l_pad >= rows_full:
        y = y[:, :rows_full]
    else:
        y = jnp.pad(y, ((0, 0), (0, rows_full - l_pad), (0, 0)))
    return y.reshape(N, OH, W_q, OC_pad)[:, :, :OW, :OC]


def conv_block_forward_nhwc(x_nhwc, weight_oihw, bias, *, stride,
                            negative_slope=0.1,
                            compute_dtype=jnp.bfloat16,
                            out_dtype=jnp.bfloat16):
    """Conv2d(VALID, stride) + LeakyReLU.  NHWC in -> NHWC out (out_dtype)."""
    N, H, W, C = x_nhwc.shape
    OC, C_w, KH, KW = weight_oihw.shape
    assert C_w == C, (C_w, C)
    S = int(stride)
    OH = (H - KH) // S + 1
    OW = (W - KW) // S + 1
    assert OH > 0 and OW > 0, (OH, OW)

    K = KH * KW * C
    OC_pad = _round_up(OC, 128)

    # Weight -> (K, OC_pad) with K ordered (kh, kw, c); OC padded to 128 lanes.
    w2d = weight_oihw.transpose(2, 3, 1, 0).reshape(K, OC)
    w2d = jnp.pad(w2d, ((0, 0), (0, OC_pad - OC))).astype(compute_dtype)
    b2d = jnp.pad(bias, (0, OC_pad - OC)).reshape(1, OC_pad).astype(jnp.float32)

    # Generation-aware VMEM budget.
    phys = _physical_vmem_bytes()
    if phys >= 128 * _MiB:                        # v5e / v6e: 128 MiB per TC
        vmem_limit = 100 * _MiB
    else:                                         # v7x: 64 MiB per TC
        vmem_limit = max(48 * _MiB, phys - 8 * _MiB)
    budget = int(vmem_limit * 0.7)

    common = dict(KH=KH, KW=KW, S=S, OH=OH, OW=OW, OC=OC, OC_pad=OC_pad,
                  negative_slope=negative_slope, compute_dtype=compute_dtype,
                  out_dtype=out_dtype, vmem_limit=vmem_limit, budget=budget)

    if C * KW < 128:
        # Small-channel layers: in-kernel per-(kh,kw) concat would be lane-waste
        # / XLU bound; do im2col in the wrapper instead.
        return _small_channel_forward(x_nhwc, w2d, b2d, **common)
    return _phase_forward(x_nhwc, w2d, b2d, **common)


def conv_block_forward_nchw(x_nchw, weight_oihw, bias, *, stride, **kw):
    y = conv_block_forward_nhwc(jnp.transpose(x_nchw, (0, 2, 3, 1)),
                                weight_oihw, bias, stride=stride, **kw)
    return jnp.transpose(y, (0, 3, 1, 2))


class ConvBlockPallas:
    """DeepPCO ConvBlock: Conv2d(C_in, C_out, k, stride, VALID) + LeakyReLU(0.1)."""

    def __init__(self, in_channels, out_channels, kernel_size, stride, key,
                 compute_dtype=jnp.bfloat16, out_dtype=jnp.bfloat16):
        if isinstance(kernel_size, int):
            kernel_size = (kernel_size, kernel_size)
        self.in_channels = in_channels
        self.out_channels = out_channels
        self.kernel_size = kernel_size
        self.stride = stride

        kw_key, kb_key = jax.random.split(key)
        kh, kw = kernel_size
        fan_in = in_channels * kh * kw
        # kaiming_normal_ (a=0, fan_in, leaky_relu) -> std = sqrt(2 / fan_in)
        std = (2.0 / fan_in) ** 0.5
        self.weight = std * jax.random.normal(
            kw_key, (out_channels, in_channels, kh, kw), dtype=jnp.float32)
        # PyTorch Conv2d default bias init: U(-1/sqrt(fan_in), 1/sqrt(fan_in))
        bound = 1.0 / (fan_in ** 0.5)
        self.bias = jax.random.uniform(
            kb_key, (out_channels,), dtype=jnp.float32,
            minval=-bound, maxval=bound)

        self._fwd_nhwc = jax.jit(functools.partial(
            conv_block_forward_nhwc, stride=stride, negative_slope=0.1,
            compute_dtype=compute_dtype, out_dtype=out_dtype))
        self._fwd_nchw = jax.jit(functools.partial(
            conv_block_forward_nchw, stride=stride, negative_slope=0.1,
            compute_dtype=compute_dtype, out_dtype=out_dtype))

    def forward_nhwc(self, x_nhwc):
        """NHWC -> NHWC path (preferred: no boundary transposes)."""
        return self._fwd_nhwc(x_nhwc, self.weight, self.bias)

    def __call__(self, x_nchw):
        # PyTorch-compatible NCHW interface.
        # TODO(synk): in a full NHWC network, call forward_nhwc directly and
        # carry the kernel's padded layout between layers to drop these
        # boundary transposes (extra HBM passes per layer).
        return self._fwd_nchw(x_nchw, self.weight, self.bias)


# ------------------------------ reference ---------------------------------- #

def _reference(x_nchw, weight, bias, stride):
    y = jax.lax.conv_general_dilated(
        x_nchw, weight, window_strides=(stride, stride), padding="VALID",
        dimension_numbers=("NCHW", "OIHW", "NCHW"))
    y = y + bias.reshape(1, -1, 1, 1)
    return jnp.where(y >= 0, y, 0.1 * y)


if __name__ == "__main__":
    key = jax.random.PRNGKey(0)
    k_param, k_x, k_param2, k_x2 = jax.random.split(key, 4)

    # ---- Primary test (small-channel path): ConvBlock(4, 8, 3, stride=2) ----
    N, C_in, H, W = 2, 4, 16, 16
    C_out, ksize, stride = 8, 3, 2

    block = ConvBlockPallas(C_in, C_out, ksize, stride, k_param)
    x = jax.random.normal(k_x, (N, C_in, H, W), dtype=jnp.float32)

    y = jax.block_until_ready(block(x))
    y32 = y.astype(jnp.float32)

    # 1) Against the true f32 module semantics (bf16 MXU path => relaxed tol).
    y_ref = _reference(x, block.weight, block.bias, stride)
    assert y.shape == y_ref.shape, (y.shape, y_ref.shape)
    assert jnp.allclose(y32, y_ref, atol=5e-2, rtol=5e-2), \
        float(jnp.max(jnp.abs(y32 - y_ref)))

    # 2) Tight check against a reference with bf16-rounded inputs/weights.
    y_ref_bf = _reference(
        x.astype(jnp.bfloat16).astype(jnp.float32),
        block.weight.astype(jnp.bfloat16).astype(jnp.float32),
        block.bias, stride)
    assert jnp.allclose(y32, y_ref_bf, atol=1e-2, rtol=1e-2), \
        float(jnp.max(jnp.abs(y32 - y_ref_bf)))

    # ---- Secondary test (in-kernel stride-phase path): ConvBlock(48, 16, 3, 2)
    N2, C2, H2, W2, OC2 = 1, 48, 12, 12, 16
    block2 = ConvBlockPallas(C2, OC2, 3, 2, k_param2)
    x2 = jax.random.normal(k_x2, (N2, C2, H2, W2), dtype=jnp.float32)

    y2 = jax.block_until_ready(block2(x2)).astype(jnp.float32)
    y2_ref = _reference(x2, block2.weight, block2.bias, 2)
    assert y2.shape == y2_ref.shape, (y2.shape, y2_ref.shape)
    assert jnp.allclose(y2, y2_ref, atol=5e-2, rtol=5e-2), \
        float(jnp.max(jnp.abs(y2 - y2_ref)))
    y2_ref_bf = _reference(
        x2.astype(jnp.bfloat16).astype(jnp.float32),
        block2.weight.astype(jnp.bfloat16).astype(jnp.float32),
        block2.bias, 2)
    assert jnp.allclose(y2, y2_ref_bf, atol=2e-2, rtol=2e-2), \
        float(jnp.max(jnp.abs(y2 - y2_ref_bf)))

    print("KERNEL_OK")
</pallas_src>

<mosaic_0001>
module attributes {stable_mosaic.version = 11 : i64} {
  func.func @_matmul_bias_lrelu_kernel(%arg0: i32, %arg1: i32, %arg2: memref<1x56x36xbf16, #tpu.memory_space<vmem>>, %arg3: memref<36x128xbf16, #tpu.memory_space<vmem>>, %arg4: memref<1x128xf32, #tpu.memory_space<vmem>>, %arg5: memref<1x56x128xbf16, #tpu.memory_space<vmem>>) attributes {dimension_semantics = [#tpu.dimension_semantics<parallel>, #tpu.dimension_semantics<parallel>], iteration_bounds = array<i64: 2, 1>, scalar_prefetch = 0 : i64, scratch_operands = 0 : i64, tpu.core_type = #tpu.core_type<tc>, window_params = [{transform_indices = @transform_0, window_bounds = array<i64: 1, 56, 36>}, {pipeline_mode = #tpu.pipeline_mode<synchronous>, transform_indices = @transform_1, window_bounds = array<i64: 36, 128>}, {pipeline_mode = #tpu.pipeline_mode<synchronous>, transform_indices = @transform_2, window_bounds = array<i64: 1, 128>}, {transform_indices = @transform_3, window_bounds = array<i64: 1, 56, 128>}]} {
    %c0 = arith.constant 0 : index
    %c0_0 = arith.constant 0 : index
    %c0_1 = arith.constant 0 : index
    %0 = vector.load %arg2[%c0, %c0_0, %c0_1] : memref<1x56x36xbf16, #tpu.memory_space<vmem>>, vector<1x56x36xbf16>
    %1 = vector.shape_cast %0 : vector<1x56x36xbf16> to vector<56x36xbf16>
    %c0_2 = arith.constant 0 : index
    %c0_3 = arith.constant 0 : index
    %2 = vector.load %arg3[%c0_2, %c0_3] : memref<36x128xbf16, #tpu.memory_space<vmem>>, vector<36x128xbf16>
    %cst = arith.constant dense<0.000000e+00> : vector<56x128xf32>
    %3 = tpu.matmul %1, %2, %cst {dimension_numbers = #tpu.dot_dimension_numbers<[1], [0], [0], [1], [0, 0, 1, 1], [], []>} : vector<56x36xbf16>, vector<36x128xbf16>, vector<56x128xf32> -> vector<56x128xf32>
    %c0_4 = arith.constant 0 : index
    %c0_5 = arith.constant 0 : index
    %4 = vector.load %arg4[%c0_4, %c0_5] : memref<1x128xf32, #tpu.memory_space<vmem>>, vector<1x128xf32>
    %5 = vector.broadcast %4 : vector<1x128xf32> to vector<56x128xf32>
    %6 = arith.addf %3, %5 : vector<56x128xf32>
    %cst_6 = arith.constant 0.000000e+00 : f32
    %7 = vector.broadcast %cst_6 : f32 to vector<56x128xf32>
    %8 = arith.cmpf oge, %6, %7 : vector<56x128xf32>
    %cst_7 = arith.constant 1.000000e-01 : f32
    %9 = vector.broadcast %cst_7 : f32 to vector<56x128xf32>
    %10 = arith.mulf %9, %6 : vector<56x128xf32>
    %11 = arith.select %8, %6, %10 : vector<56x128xi1>, vector<56x128xf32>
    %12 = arith.truncf %11 : vector<56x128xf32> to vector<56x128xbf16>
    %c0_8 = arith.constant 0 : index
    %c0_9 = arith.constant 0 : index
    %c0_10 = arith.constant 0 : index
    %13 = vector.load %arg5[%c0_8, %c0_9, %c0_10] : memref<1x56x128xbf16, #tpu.memory_space<vmem>>, vector<1x56x128xbf16>
    %14 = vector.shape_cast %13 : vector<1x56x128xbf16> to vector<56x128xbf16>
    %15 = vector.shape_cast %12 : vector<56x128xbf16> to vector<1x56x128xbf16>
    tpu.vector_store %arg5[%c0_8, %c0_9, %c0_10], %15 {strides = array<i32>} : memref<1x56x128xbf16, #tpu.memory_space<vmem>>, vector<1x56x128xbf16>,
    return
  }
  func.func @transform_0(%arg0: i32, %arg1: i32) -> (i32, i32, i32) {
    %c0_i32 = arith.constant 0 : i32
    %c0_i32_0 = arith.constant 0 : i32
    return %arg0, %arg1, %c0_i32 : i32, i32, i32
  }
  func.func @transform_1(%arg0: i32, %arg1: i32) -> (i32, i32) {
    %c0_i32 = arith.constant 0 : i32
    %c0_i32_0 = arith.constant 0 : i32
    %c0_i32_1 = arith.constant 0 : i32
    return %c0_i32, %c0_i32_0 : i32, i32
  }
  func.func @transform_2(%arg0: i32, %arg1: i32) -> (i32, i32) {
    %c0_i32 = arith.constant 0 : i32
    %c0_i32_0 = arith.constant 0 : i32
    %c0_i32_1 = arith.constant 0 : i32
    return %c0_i32, %c0_i32_0 : i32, i32
  }
  func.func @transform_3(%arg0: i32, %arg1: i32) -> (i32, i32, i32) {
    %c0_i32 = arith.constant 0 : i32
    %c0_i32_0 = arith.constant 0 : i32
    return %arg0, %arg1, %c0_i32 : i32, i32, i32
  }
}

</mosaic_0001>

<llo_original>
// kernel: conv_block_forward_nchw.1
$region0: #{conv_block_forward_nchw.1}
  #allocation0 [shape = 'u32[]', space=smem, size = 0x4, offset = 0x4, fixed_abs, tag = 'smem constant byte address 0x4 - core index']
  #allocation1 [shape = 'u32[72,128]{1,0:T(1,128)}', space=vmem, size = 0x9000, scoped, tag = 'internal scratch']
  %s0 = inlined_call_operand.vmem [shape: bf16[2,56,36], index: 0, kind: input, shape index: {}]
  %s1 = inlined_call_operand.vmem [shape: bf16[36,128], index: 1, kind: input, shape index: {}]
  %s2 = inlined_call_operand.vmem [shape: f32[1,128], index: 2, kind: input, shape index: {}]
  %s3 = inlined_call_operand.vmem [shape: bf16[2,56,128], index: 3, kind: output, shape index: {}]
  %s4 = sld [smem:[#allocation0]]
  $region45: #{conv_block_forward_nchw.1} parent=0
    _
  %s6 = ssub.s32 1, %s4
  %s7 = scalar_select 0, %s6, %s4
  loop: start=0, step=1, limit=4
  $region2: #{conv_block_forward_nchw.1} parent=0 // loop_pre_header
    _
  $region3: #{conv_block_forward_nchw.1} parent=0 // loop_header
    %s9 = sphi 0, %s13
    %p10 = scmp.ge.s32.totalorder %s9, 4
    %s16 = sphi 0, %s28
    %s17 = sphi 0, %s24
    %s18 = sphi 0, %s16
    %s19 = sphi 0, %s17
    %s20 = sphi 0, %s18
    %s21 = sphi 0, %s19
    %s33 = sphi 0, %s35
    %s36 = sphi 0, %s33
    %s37 = sphi 0, %s36
    %s53 = sphi 0, %s37
    %s57 = sphi 0, %s57
    %s59 = sphi 0, %s57
    %s60 = sphi 0, %s59
    %s74 = sphi 0, %s60
    %s78 = sphi 0, %s78
    %s80 = sphi 0, %s78
    %s81 = sphi 0, %s80
    %s95 = sphi 0, %s81
    %s103 = sphi 0, %s105
    %s106 = sphi 0, %s103
    %s107 = sphi 0, %s106
    %s123 = sphi 0, %s107
  $region4: #{conv_block_forward_nchw.1} parent=0 // loop_header_branch
    %12 = sbr.rel (%p10) target = $region8
  $region5: #{conv_block_forward_nchw.1} parent=0 // loop_body
    %s14 = ssub.s32 %s9, 1
    %s15 = ssub.s32 %s9, 2
    %s22 = sadd.s32 1, %s17
    %p23 = scmp.ge.s32.totalorder %s22, 1
    %s24 = scalar_select %p23, 0, %s22
    %s25 = sadd.s32 1, %s16
    %s26 = scalar_select %p23, %s25, %s16
    %p27 = scmp.ge.s32.totalorder %s26, 2
    %s28 = scalar_select %p27, 0, %s26
    %s29 = ssub.s32 %s16, %s28
    %s30 = ssub.s32 %s17, %s24
    %s31 = sor.u32 %s29, %s30
    %p32 = scmp.eq.s32.totalorder %s31, 0
    %s34 = sadd.s32 %s33, 1
    %s35 = scalar_select %p32, %s33, %s34
    %p38 = pneg %p32
    %p39 = scmp.eq.s32.totalorder %s9, 1
    %p40 = por %p38, %p39
    %p41 = scmp.ne.s32.totalorder %s33, %s36
    %p42 = scmp.eq.s32.totalorder %s9, 0
    %p43 = por %p41, %p42
    %p44 = scmp.ne.s32.totalorder %s33, %s36
    %p45 = scmp.eq.s32.totalorder %s14, 1
    %p46 = por %p44, %p45
    %p47 = scmp.ne.s32.totalorder %s36, %s37
    %p48 = scmp.eq.s32.totalorder %s14, 0
    %p49 = por %p47, %p48
    %p50 = scmp.ne.s32.totalorder %s36, %s37
    %p51 = scmp.eq.s32.totalorder %s15, 1
    %p52 = por %p50, %p51
    %p54 = scmp.ne.s32.totalorder %s37, %s53
    %p55 = scmp.eq.s32.totalorder %s15, 0
    %p56 = por %p54, %p55
    %s58 = sadd.s32 %s57, 1
    %p61 = scmp.eq.s32.totalorder %s9, 1
    %p62 = scmp.ne.s32.totalorder %s57, %s59
    %p63 = scmp.eq.s32.totalorder %s9, 0
    %p64 = por %p62, %p63
    %p65 = scmp.ne.s32.totalorder %s57, %s59
    %p66 = scmp.eq.s32.totalorder %s14, 1
    %p67 = por %p65, %p66
    %p68 = scmp.ne.s32.totalorder %s59, %s60
    %p69 = scmp.eq.s32.totalorder %s14, 0
    %p70 = por %p68, %p69
    %p71 = scmp.ne.s32.totalorder %s59, %s60
    %p72 = scmp.eq.s32.totalorder %s15, 1
    %p73 = por %p71, %p72
    %p75 = scmp.ne.s32.totalorder %s60, %s74
    %p76 = scmp.eq.s32.totalorder %s15, 0
    %p77 = por %p75, %p76
    %s79 = sadd.s32 %s78, 1
    %p82 = scmp.eq.s32.totalorder %s9, 1
    %p83 = scmp.ne.s32.totalorder %s78, %s80
    %p84 = scmp.eq.s32.totalorder %s9, 0
    %p85 = por %p83, %p84
    %p86 = scmp.ne.s32.totalorder %s78, %s80
    %p87 = scmp.eq.s32.totalorder %s14, 1
    %p88 = por %p86, %p87
    %p89 = scmp.ne.s32.totalorder %s80, %s81
    %p90 = scmp.eq.s32.totalorder %s14, 0
    %p91 = por %p89, %p90
    %p92 = scmp.ne.s32.totalorder %s80, %s81
    %p93 = scmp.eq.s32.totalorder %s15, 1
    %p94 = por %p92, %p93
    %p96 = scmp.ne.s32.totalorder %s81, %s95
    %p97 = scmp.eq.s32.totalorder %s15, 0
    %p98 = por %p96, %p97
    %s99 = ssub.s32 %s16, %s28
    %s100 = ssub.s32 %s17, %s24
    %s101 = sor.u32 %s99, %s100
    %p102 = scmp.eq.s32.totalorder %s101, 0
    %s104 = sadd.s32 %s103, 1
    %s105 = scalar_select %p102, %s103, %s104
    %p108 = pneg %p102
    %p109 = scmp.eq.s32.totalorder %s9, 1
    %p110 = por %p108, %p109
    %p111 = scmp.ne.s32.totalorder %s103, %s106
    %p112 = scmp.eq.s32.totalorder %s9, 0
    %p113 = por %p111, %p112
    %p114 = scmp.ne.s32.totalorder %s103, %s106
    %p115 = scmp.eq.s32.totalorder %s14, 1
    %p116 = por %p114, %p115
    %p117 = scmp.ne.s32.totalorder %s106, %s107
    %p118 = scmp.eq.s32.totalorder %s14, 0
    %p119 = por %p117, %p118
    %p120 = scmp.ne.s32.totalorder %s106, %s107
    %p121 = scmp.eq.s32.totalorder %s15, 1
    %p122 = por %p120, %p121
    %p124 = scmp.ne.s32.totalorder %s107, %s123
    %p125 = scmp.eq.s32.totalorder %s15, 0
    %p126 = por %p124, %p125
    %p127 = scmp.le.s32.totalorder 1, %s9
    %p128 = scmp.lt.s32.totalorder %s9, 3
    %p129 = pnand %p127, %p128
    %p130 = pneg %p129
    // Predicated region
    $region9: #{conv_block_forward_nchw.1} parent=5 // pred_check
      _
    $region10: #{conv_block_forward_nchw.1} parent=5 // pred_check_branch
      %132 = sbr.rel (%p129) target = $region12
    $region11: #{conv_block_forward_nchw.1} parent=5 // pred_region
      %s133 = ssub.s32 %s9, 1
      // Predicated region
      $region13: #{conv_block_forward_nchw.1} parent=11 // pred_check
        %p134 = pneg %p70
      $region14: #{conv_block_forward_nchw.1} parent=11 // pred_check_branch
        %136 = sbr.rel (%p134) target = $region16
      $region15: #{conv_block_forward_nchw.1} parent=11 // pred_region
        _
      $region16: #{conv_block_forward_nchw.1} parent=11 // pred_fallthru
        _
      // Predicated region
      $region17: #{conv_block_forward_nchw.1} parent=11 // pred_check
        %p137 = pneg %p91
      $region18: #{conv_block_forward_nchw.1} parent=11 // pred_check_branch
        %139 = sbr.rel (%p137) target = $region20
      $region19: #{conv_block_forward_nchw.1} parent=11 // pred_region
        _
      $region20: #{conv_block_forward_nchw.1} parent=11 // pred_fallthru
        _
    $region12: #{conv_block_forward_nchw.1} parent=5 // pred_fallthru
      _
    %p140 = scmp.lt.s32.totalorder %s9, 2
    // Predicated region
    $region21: #{conv_block_forward_nchw.1} parent=5 // pred_check
      %p141 = pneg %p140
    $region22: #{conv_block_forward_nchw.1} parent=5 // pred_check_branch
      %143 = sbr.rel (%p141) target = $region24
    $region23: #{conv_block_forward_nchw.1} parent=5 // pred_region
      // Predicated region
      $region25: #{conv_block_forward_nchw.1} parent=23 // pred_check
        %p144 = pneg %p43
      $region26: #{conv_block_forward_nchw.1} parent=23 // pred_check_branch
        %146 = sbr.rel (%p144) target = $region28
      $region27: #{conv_block_forward_nchw.1} parent=23 // pred_region
        %s147 = smul.u32 7, %s17
        %p148 = scmp.lt.s32.totalorder %s16, 1
        %s149 = scalar_select %p148, %s16, 1
        %p150 = scmp.lt.s32.totalorder %s147, 6
        %s151 = scalar_select %p150, %s147, 6
        %s152 = smul.addr %s149, 7
        %s153 = sadd.s32 %s151, %s152
        %s154 = smul.addr %s153, 4
        %s155 = scalar_lea.vmem %s0, %s154
        %s156 = smul.u32 7, %s17
      $region28: #{conv_block_forward_nchw.1} parent=23 // pred_fallthru
        _
    $region24: #{conv_block_forward_nchw.1} parent=5 // pred_fallthru
      _
    %p157 = scmp.le.s32.totalorder 1, %s9
    %p158 = scmp.lt.s32.totalorder %s9, 3
    %p159 = pnand %p157, %p158
    %p160 = pneg %p159
    // Predicated region
    $region29: #{conv_block_forward_nchw.1} parent=5 // pred_check
      _
    $region30: #{conv_block_forward_nchw.1} parent=5 // pred_check_branch
      %162 = sbr.rel (%p159) target = $region32
    $region31: #{conv_block_forward_nchw.1} parent=5 // pred_region
      %s163 = ssub.s32 %s9, 1
      %s164 = smul.u32 7, %s19
      %p165 = scmp.lt.s32.totalorder %s18, 1
      %s166 = scalar_select %p165, %s18, 1
      %p167 = scmp.lt.s32.totalorder %s164, 6
      %s168 = scalar_select %p167, %s164, 6
      %s169 = smul.addr %s166, 7
      %s170 = sadd.s32 %s168, %s169
      %s171 = smul.addr %s170, 4
      %s172 = scalar_lea.vmem %s0, %s171
      %p173 = pneg %p49
      %p174 = pneg %p46
      %p175 = pneg %p70
      %p176 = pneg %p67
      %p177 = pneg %p91
      %p178 = pneg %p88
      %p179 = pneg %p119
      %p180 = pneg %p116
      %s181 = smul.u32 7, %s19
      %p182 = scmp.lt.s32.totalorder %s18, 1
      %s183 = scalar_select %p182, %s18, 1
      %p184 = scmp.lt.s32.totalorder %s181, 6
      %s185 = scalar_select %p184, %s181, 6
      %s186 = smul.addr %s183, 7
      %s187 = sadd.s32 %s185, %s186
      %s188 = smul.addr %s187, 4
      %s189 = scalar_lea.vmem %s3, %s188
      %s190 = smul.u32 7, %s19
      %p191 = scmp.lt.s32.totalorder %s18, 1
      %s192 = scalar_select %p191, %s18, 1
      %p193 = scmp.lt.s32.totalorder %s190, 6
      %s194 = scalar_select %p193, %s190, 6
      %s195 = smul.addr %s192, 7
      %s196 = sadd.s32 %s194, %s195
      %s197 = smul.addr %s196, 4
      %s198 = scalar_lea.vmem %s0, %s197
      %s199 = smul.u32 7, %s19
      %s200 = smul.u32 7, %s19
      %p201 = scmp.lt.s32.totalorder %s18, 1
      %s202 = scalar_select %p201, %s18, 1
      %p203 = scmp.lt.s32.totalorder %s200, 6
      %s204 = scalar_select %p203, %s200, 6
      %s205 = smul.addr %s202, 7
      %s206 = sadd.s32 %s204, %s205
      %s207 = smul.addr %s206, 4
      %s208 = scalar_lea.vmem %s3, %s207
      %s209 = smul.u32 7, %s19
      %v211 = vld [vmem:[%s198] sm:$0xf]
      %v212 = vld [vmem:[%s198 + $0x4] sm:$0xf]
      %v213 = vld [vmem:[%s198 + $0x8] sm:$0xf]
      %v214 = vld [vmem:[%s198 + $0xc] sm:$0xf]
      %v215 = vld [vmem:[%s198 + $0x10] sm:$0xf]
      %v216 = vld [vmem:[%s198 + $0x14] sm:$0xf]
      %v217 = vld [vmem:[%s198 + $0x18] sm:$0xf]
      %v218 = vld [vmem:[%s1] sm:$0xf]
      %v219 = vld [vmem:[%s1 + $0x4] sm:$0xf]
      %v220 = vld [vmem:[%s1 + $0x8] sm:$0xf]
      %v221 = vld [vmem:[%s1 + $0xc] sm:$0xf]
      %v222 = vld [vmem:[%s1 + $0x10] sm:$0x3]
      %v223 = vld [vmem:[%s2] sm:$0x1]
      %v225 = vperm.slane %v223, 0
      %v234 = vunpack.c.l.b16 %v211
      %v235 = vunpack.c.l.b16 %v212
      %v236 = vunpack.c.l.b16 %v213
      %v237 = vunpack.c.l.b16 %v214
      %v238 = vunpack.c.l.b16 %v215
      %v239 = vunpack.c.l.b16 %v216
      %v240 = vunpack.c.l.b16 %v217
      %v241 = vpack.c.b16 %v235, %v234
      %v242 = vpack.c.b16 %v237, %v236
      %v243 = vpack.c.b16 %v239, %v238
      %v244 = vpack.c.b16 %v240, %v240
      %v250 = vunpack.c.l.b16 %v218
      %v251 = vunpack.c.l.b16 %v219
      %v252 = vunpack.c.l.b16 %v220
      %v253 = vunpack.c.l.b16 %v221
      %v254 = vunpack.c.l.b16 %v222
      %v255 = vpack.c.b16 %v251, %v250
      %v256 = vpack.c.b16 %v253, %v252
      %v257 = vpack.c.b16 %v254, %v254
      %vm260 = vcmask 293888
      %v262 = vsel %vm260, %v241, 0
      %v265 = vsel %vm260, %v242, 0
      %v268 = vsel %vm260, %v243, 0
      %v271 = vsel %vm260, %v244, 0
      %vm273 = vcmask 1041408
      %v275 = vsel %vm273, %v257, 0
      %277 = vmatpush.bf16.msra.mxu0 0
      %278 = vmatpush.bf16.msra.mxu0 0
      %279 = vmatpush.bf16.msra.mxu0 0
      %280 = vmatpush.bf16.msra.mxu0 0
      %281 = vmatpush.bf16.msra.mxu0 0
      %282 = vmatpush.bf16.msra.mxu0 %v275
      %283 = vmatpush.bf16.msra.mxu0 %v256
      %284 = vmatpush.bf16.msra.mxu0 %v255
      %285 = vmatmul.bf16.gmra.mxu0 %v262
      %v286 = vpop.f32.mrf.mxu0
      %v287 = vadd.f32 %v225, %v286
      %v288 = vpop.f32.mrf.mxu0
      %v289 = vadd.f32 %v225, %v288
      %290 = vmatmul.bf16.gmra.mxu0 %v265
      %v291 = vpop.f32.mrf.mxu0
      %v292 = vadd.f32 %v225, %v291
      %v293 = vpop.f32.mrf.mxu0
      %v294 = vadd.f32 %v225, %v293
      %295 = vmatmul.bf16.gmra.mxu0 %v268
      %v296 = vpop.f32.mrf.mxu0
      %v297 = vadd.f32 %v225, %v296
      %v298 = vpop.f32.mrf.mxu0
      %v299 = vadd.f32 %v225, %v298
      %300 = vmatmul.bf16.gmra.mxu0 %v271
      %v301 = vpop.f32.mrf.mxu0
      %v302 = vadd.f32 %v225, %v301
      %v303 = vpop.f32.mrf.mxu0
      %304 = vdwg.mxu0
      %vm305 = vcmp.ge.f32.partialorder %v287, 0.0
      %vm306 = vcmp.ge.f32.partialorder %v289, 0.0
      %vm307 = vcmp.ge.f32.partialorder %v292, 0.0
      %vm308 = vcmp.ge.f32.partialorder %v294, 0.0
      %vm309 = vcmp.ge.f32.partialorder %v297, 0.0
      %vm310 = vcmp.ge.f32.partialorder %v299, 0.0
      %vm311 = vcmp.ge.f32.partialorder %v302, 0.0
      %v312 = vmul.f32 %v287, 0.1
      %v313 = vmul.f32 %v289, 0.1
      %v314 = vmul.f32 %v292, 0.1
      %v315 = vmul.f32 %v294, 0.1
      %v316 = vmul.f32 %v297, 0.1
      %v317 = vmul.f32 %v299, 0.1
      %v318 = vmul.f32 %v302, 0.1
      %v319 = vsel %vm305, %v287, %v312
      %v320 = vsel %vm306, %v289, %v313
      %v321 = vsel %vm307, %v292, %v314
      %v322 = vsel %vm308, %v294, %v315
      %v323 = vsel %vm309, %v297, %v316
      %v324 = vsel %vm310, %v299, %v317
      %v325 = vsel %vm311, %v302, %v318
      %v326 = vpack.c.bf16 %v319, %v319
      %v327 = vpack.c.bf16 %v320, %v320
      %v328 = vpack.c.bf16 %v321, %v321
      %v329 = vpack.c.bf16 %v322, %v322
      %v330 = vpack.c.bf16 %v323, %v323
      %v331 = vpack.c.bf16 %v324, %v324
      %v332 = vpack.c.bf16 %v325, %v325
      %333 = vst [vmem:[%s208] sm:$0xf] %v326
      %334 = vst [vmem:[%s208 + $0x4] sm:$0xf] %v327
      %335 = vst [vmem:[%s208 + $0x8] sm:$0xf] %v328
      %336 = vst [vmem:[%s208 + $0xc] sm:$0xf] %v329
      %337 = vst [vmem:[%s208 + $0x10] sm:$0xf] %v330
      %338 = vst [vmem:[%s208 + $0x14] sm:$0xf] %v331
      %339 = vst [vmem:[%s208 + $0x18] sm:$0xf] %v332
      %s340 = smul.u32 7, %s19
      %p341 = scmp.lt.s32.totalorder %s18, 1
      %s342 = scalar_select %p341, %s18, 1
      %p343 = scmp.lt.s32.totalorder %s340, 6
      %s344 = scalar_select %p343, %s340, 6
      %s345 = smul.addr %s342, 7
      %s346 = sadd.s32 %s344, %s345
      %s347 = smul.addr %s346, 4
      %s348 = scalar_lea.vmem %s3, %s347
      // Predicated region
      $region33: #{conv_block_forward_nchw.1} parent=31 // pred_check
        %p349 = pneg %p116
      $region34: #{conv_block_forward_nchw.1} parent=31 // pred_check_branch
        %351 = sbr.rel (%p349) target = $region36
      $region35: #{conv_block_forward_nchw.1} parent=31 // pred_region
        %s352 = smul.u32 7, %s19
      $region36: #{conv_block_forward_nchw.1} parent=31 // pred_fallthru
        _
    $region32: #{conv_block_forward_nchw.1} parent=5 // pred_fallthru
      _
    %p353 = scmp.le.s32.totalorder 2, %s9
    // Predicated region
    $region37: #{conv_block_forward_nchw.1} parent=5 // pred_check
      %p354 = pneg %p353
    $region38: #{conv_block_forward_nchw.1} parent=5 // pred_check_branch
      %356 = sbr.rel (%p354) target = $region40
    $region39: #{conv_block_forward_nchw.1} parent=5 // pred_region
      %s357 = ssub.s32 %s9, 2
      // Predicated region
      $region41: #{conv_block_forward_nchw.1} parent=39 // pred_check
        %p358 = pneg %p122
      $region42: #{conv_block_forward_nchw.1} parent=39 // pred_check_branch
        %360 = sbr.rel (%p358) target = $region44
      $region43: #{conv_block_forward_nchw.1} parent=39 // pred_region
        %s361 = smul.u32 7, %s21
        %p362 = scmp.lt.s32.totalorder %s20, 1
        %s363 = scalar_select %p362, %s20, 1
        %p364 = scmp.lt.s32.totalorder %s361, 6
        %s365 = scalar_select %p364, %s361, 6
        %s366 = smul.addr %s363, 7
        %s367 = sadd.s32 %s365, %s366
        %s368 = smul.addr %s367, 4
        %s369 = scalar_lea.vmem %s3, %s368
      $region44: #{conv_block_forward_nchw.1} parent=39 // pred_fallthru
        _
    $region40: #{conv_block_forward_nchw.1} parent=5 // pred_fallthru
      _
  $region6: #{conv_block_forward_nchw.1} parent=0 // loop_footer
    %s13 = sadd.s32 1, %s9
  $region7: #{conv_block_forward_nchw.1} parent=0 // loop_footer_branch
    %8 = sbr.rel target = $region3
  $region8: #{conv_block_forward_nchw.1} parent=0 // loop_exit
    _

</llo_original>
